<compile_context>
chip_gen: v5e
topology: v5e:2x2
jax: 0.10.0
libtpu: 0.0.40
codegen_flags: <defaults>
</compile_context>

<pallas_src>
import functools

import jax
import jax.numpy as jnp
from jax.experimental import pallas as pl
from jax.experimental.pallas import tpu as pltpu


def _round_up(x, m):
    return -(-x // m) * m


def _vmem_budget_and_limit():
    """Generation-aware scoped-VMEM budget (for tile sizing) and limit."""
    try:
        cap = int(pltpu.get_tpu_info().vmem_capacity_bytes)
    except Exception:
        cap = 64 * 1024 * 1024            # conservative: v7x per-TensorCore VMEM
    budget = (cap * 3) // 8               # 48 MiB on 128 MiB parts, 24 MiB on v7x
    limit = min(cap // 2, 96 * 1024 * 1024)
    return budget, limit


def _enm_classifier_kernel(x_ref, enm_ref, wseq_ref, wenm_ref, b_ref, o_ref,
                           *, r, tn):
    # x_ref:    (tm//r, r, D) if r > 1 else (tm, D)   -- native dtype
    # enm_ref:  (tm//r, r)                            -- native dtype
    # wseq_ref: (D, tn)                               -- native dtype (MXU operand)
    # wenm_ref: (1, tn)  f32
    # b_ref:    (1, tn)  f32
    # o_ref:    (tm//r, r*tn)
    w = wseq_ref[...]
    w_enm = wenm_ref[...]
    b = b_ref[...]
    for p in range(r):                                  # static unroll (r <= 16)
        x_p = x_ref[:, p, :] if r > 1 else x_ref[...]   # (rows, D), native dtype
        enm_p = enm_ref[:, p:p + 1].astype(jnp.float32)  # (rows, 1)
        acc = jnp.dot(x_p, w, preferred_element_type=jnp.float32)
        acc = acc + enm_p * w_enm + b
        o_ref[:, p * tn:(p + 1) * tn] = acc.astype(o_ref.dtype)


def enm_adapted_direct_classifier(seq_embedding, enm_input, weight, bias, *,
                                  vmem_budget_bytes=None,
                                  vmem_limit_bytes=None):
    """seq_embedding: (B, L, D), enm_input: (B, L),
    weight: (O, D+1), bias: (O,)  ->  logits (B, L, O)."""
    B, L, D = seq_embedding.shape
    O, Dp1 = weight.shape
    assert Dp1 == D + 1, "weight must be (out_dim, seq_embedding_dim + 1)"
    M = B * L
    in_dtype = seq_embedding.dtype
    out_dtype = in_dtype
    in_isz = jnp.dtype(in_dtype).itemsize
    out_isz = jnp.dtype(out_dtype).itemsize

    budget, limit = _vmem_budget_and_limit()
    if vmem_budget_bytes is not None:
        budget = vmem_budget_bytes
    if vmem_limit_bytes is not None:
        limit = vmem_limit_bytes

    # ---- one-time weight preparation (hoisted out of the per-tile body) ----
    w_t = weight.T                               # (D+1, O)
    w_seq = w_t[:D].astype(in_dtype)             # (D, O) native dtype -> MXU
    w_enm = w_t[D:].astype(jnp.float32).reshape(1, O)
    b = bias.astype(jnp.float32).reshape(1, O)

    # ---- row-packing factor for lane-dense output (only when free) ----
    # Requires r >= 8 (no sublane padding on the x view) and M % r == 0.
    r = 1
    if 0 < O <= 16:
        cand = min(128 // O, 16)
        if cand >= 8 and M % cand == 0:
            r = cand
    # TODO(synk): generalize packing to out_dims in (16, 128) that don't divide
    # 128 (e.g. 20-33 residue classes) via a concat-based packed store.

    # ---- output-column tiling (classifier-sized out_dim only) ----
    tn = O
    if r == 1 and O > 512:
        tn = 512
        while tn > 128 and 2 * _round_up(D, 8) * _round_up(tn, 128) * in_isz > budget // 2:
            tn //= 2
    grid_n = pl.cdiv(O, tn)

    granule = 8 * r

    def vmem_need(tm):
        rows = tm // r
        rows8 = _round_up(rows, 8)
        if r > 1:
            x_b = rows * _round_up(r, 8) * _round_up(D, 128) * in_isz
        else:
            x_b = rows8 * _round_up(D, 128) * in_isz
        enm_b = rows8 * 128 * in_isz
        out_b = rows8 * _round_up(r * tn, 128) * out_isz
        w_b = _round_up(D, 8) * _round_up(tn, 128) * in_isz
        small_b = 2 * 8 * _round_up(tn, 128) * 4
        return 2 * (x_b + enm_b + out_b + w_b + small_b)   # double-buffered

    # Largest budget-fitting row tile; then aim for >= ~8 grid steps (pipeline
    # depth + v7x megacore) without dropping below ~512 rows per step.
    tm = _round_up(min(max(M, granule), 1 << 16), granule)
    while tm > granule and vmem_need(tm) > budget:
        tm = max(granule, _round_up(tm // 2, granule))
    target_tm = max(_round_up(512, granule), _round_up(pl.cdiv(M, 8), granule))
    tm = max(granule, min(tm, target_tm))

    if tm >= M:
        tm = M                      # single block: every dim is a full extent
        grid_m = 1
    else:
        grid_m = pl.cdiv(M, tm)     # partial last block handled by Pallas

    # ---- logical views (free row-major metadata reshapes, no HBM copies) ----
    x = seq_embedding.reshape(M, D)
    if r > 1:
        x = x.reshape(M // r, r, D)
        x_spec = pl.BlockSpec((tm // r, r, D), lambda i, j: (i, 0, 0))
    else:
        x_spec = pl.BlockSpec((tm, D), lambda i, j: (i, 0))
    enm = enm_input.reshape(M // r, r).astype(in_dtype)

    kernel = functools.partial(_enm_classifier_kernel, r=r, tn=tn)

    cost = pl.CostEstimate(
        flops=2 * M * D * O + 3 * M * O,
        transcendentals=0,
        bytes_accessed=in_isz * (M * D + M + D * O) + out_isz * M * O + 8 * O,
    )

    out = pl.pallas_call(
        kernel,
        out_shape=jax.ShapeDtypeStruct((M // r, r * O), out_dtype),
        grid_spec=pltpu.PrefetchScalarGridSpec(
            num_scalar_prefetch=0,
            grid=(grid_m, grid_n),
            in_specs=[
                x_spec,
                pl.BlockSpec((tm // r, r), lambda i, j: (i, 0)),
                pl.BlockSpec((D, tn), lambda i, j: (0, j)),
                pl.BlockSpec((1, tn), lambda i, j: (0, j)),
                pl.BlockSpec((1, tn), lambda i, j: (0, j)),
            ],
            out_specs=pl.BlockSpec((tm // r, r * tn), lambda i, j: (i, j)),
        ),
        compiler_params=pltpu.CompilerParams(
            dimension_semantics=("parallel", "parallel"),
            vmem_limit_bytes=int(limit),
        ),
        cost_estimate=cost,
    )(x, enm, w_seq, w_enm, b)

    # (M//r, r*O) -> (B, L, O) is a pure row-major reinterpretation.
    return out.reshape(B, L, O)


if __name__ == "__main__":
    # Small shapes consistent with the module's forward.
    B, L, D, O = 2, 8, 32, 16          # batch, seq-len, seq_embedding_dim, out_dim

    key = jax.random.PRNGKey(0)
    k1, k2, k3, k4 = jax.random.split(key, 4)

    seq_embedding = jax.random.normal(k1, (B, L, D), dtype=jnp.float32)
    enm_input = jax.random.normal(k2, (B, L), dtype=jnp.float32)

    # Deterministic nn.Linear-style init: U(-1/sqrt(fan_in), 1/sqrt(fan_in)).
    fan_in = D + 1
    bound = 1.0 / (fan_in ** 0.5)
    weight = jax.random.uniform(k3, (O, D + 1), jnp.float32, -bound, bound)
    bias = jax.random.uniform(k4, (O,), jnp.float32, -bound, bound)

    logits = enm_adapted_direct_classifier(seq_embedding, enm_input, weight, bias)
    logits = jax.block_until_ready(logits)

    # Pure-JAX reference (mirrors the PyTorch forward exactly).
    combined = jnp.concatenate([seq_embedding, enm_input[..., None]], axis=-1)
    ref = combined @ weight.T + bias

    assert logits.shape == (B, L, O)
    assert jnp.allclose(logits, ref, atol=1e-4, rtol=1e-4), \
        float(jnp.max(jnp.abs(logits - ref)))
    print("KERNEL_OK")
</pallas_src>

<mosaic_0001>
module attributes {stable_mosaic.version = 11 : i64} {
  func.func @_enm_classifier_kernel(%arg0: i32, %arg1: i32, %arg2: memref<2x8x32xf32, #tpu.memory_space<vmem>>, %arg3: memref<2x8xf32, #tpu.memory_space<vmem>>, %arg4: memref<32x16xf32, #tpu.memory_space<vmem>>, %arg5: memref<1x16xf32, #tpu.memory_space<vmem>>, %arg6: memref<1x16xf32, #tpu.memory_space<vmem>>, %arg7: memref<2x128xf32, #tpu.memory_space<vmem>>) attributes {dimension_semantics = [#tpu.dimension_semantics<parallel>, #tpu.dimension_semantics<parallel>], iteration_bounds = array<i64: 1, 1>, scalar_prefetch = 0 : i64, scratch_operands = 0 : i64, tpu.core_type = #tpu.core_type<tc>, window_params = [{transform_indices = @transform_0, window_bounds = array<i64: 2, 8, 32>}, {transform_indices = @transform_1, window_bounds = array<i64: 2, 8>}, {transform_indices = @transform_2, window_bounds = array<i64: 32, 16>}, {transform_indices = @transform_3, window_bounds = array<i64: 1, 16>}, {transform_indices = @transform_4, window_bounds = array<i64: 1, 16>}, {transform_indices = @transform_5, window_bounds = array<i64: 2, 128>}]} {
    %c0 = arith.constant 0 : index
    %c0_0 = arith.constant 0 : index
    %0 = vector.load %arg4[%c0, %c0_0] : memref<32x16xf32, #tpu.memory_space<vmem>>, vector<32x16xf32>
    %c0_1 = arith.constant 0 : index
    %c0_2 = arith.constant 0 : index
    %1 = vector.load %arg5[%c0_1, %c0_2] : memref<1x16xf32, #tpu.memory_space<vmem>>, vector<1x16xf32>
    %c0_3 = arith.constant 0 : index
    %c0_4 = arith.constant 0 : index
    %2 = vector.load %arg6[%c0_3, %c0_4] : memref<1x16xf32, #tpu.memory_space<vmem>>, vector<1x16xf32>
    %c0_5 = arith.constant 0 : index
    %c0_6 = arith.constant 0 : index
    %c0_7 = arith.constant 0 : index
    %3 = vector.load %arg2[%c0_5, %c0_6, %c0_7] : memref<2x8x32xf32, #tpu.memory_space<vmem>>, vector<2x1x32xf32>
    %4 = vector.shape_cast %3 : vector<2x1x32xf32> to vector<2x32xf32>
    %c0_8 = arith.constant 0 : index
    %c0_9 = arith.constant 0 : index
    %5 = vector.load %arg3[%c0_8, %c0_9] : memref<2x8xf32, #tpu.memory_space<vmem>>, vector<2x1xf32>
    %cst = arith.constant dense<0.000000e+00> : vector<2x16xf32>
    %6 = tpu.matmul %4, %0, %cst {dimension_numbers = #tpu.dot_dimension_numbers<[1], [0], [0], [1], [0, 0, 1, 1], [], []>} : vector<2x32xf32>, vector<32x16xf32>, vector<2x16xf32> -> vector<2x16xf32>
    %7 = vector.broadcast %5 : vector<2x1xf32> to vector<2x16xf32>
    %8 = vector.broadcast %1 : vector<1x16xf32> to vector<2x16xf32>
    %9 = arith.mulf %7, %8 : vector<2x16xf32>
    %10 = arith.addf %6, %9 : vector<2x16xf32>
    %11 = vector.broadcast %2 : vector<1x16xf32> to vector<2x16xf32>
    %12 = arith.addf %10, %11 : vector<2x16xf32>
    %c0_10 = arith.constant 0 : index
    %c0_11 = arith.constant 0 : index
    %13 = vector.load %arg7[%c0_10, %c0_11] : memref<2x128xf32, #tpu.memory_space<vmem>>, vector<2x16xf32>
    tpu.vector_store %arg7[%c0_10, %c0_11], %12 {strides = array<i32>} : memref<2x128xf32, #tpu.memory_space<vmem>>, vector<2x16xf32>,
    %c0_12 = arith.constant 0 : index
    %c1 = arith.constant 1 : index
    %c0_13 = arith.constant 0 : index
    %14 = vector.load %arg2[%c0_12, %c1, %c0_13] : memref<2x8x32xf32, #tpu.memory_space<vmem>>, vector<2x1x32xf32>
    %15 = vector.shape_cast %14 : vector<2x1x32xf32> to vector<2x32xf32>
    %c0_14 = arith.constant 0 : index
    %c1_15 = arith.constant 1 : index
    %16 = vector.load %arg3[%c0_14, %c1_15] : memref<2x8xf32, #tpu.memory_space<vmem>>, vector<2x1xf32>
    %cst_16 = arith.constant dense<0.000000e+00> : vector<2x16xf32>
    %17 = tpu.matmul %15, %0, %cst_16 {dimension_numbers = #tpu.dot_dimension_numbers<[1], [0], [0], [1], [0, 0, 1, 1], [], []>} : vector<2x32xf32>, vector<32x16xf32>, vector<2x16xf32> -> vector<2x16xf32>
    %18 = vector.broadcast %16 : vector<2x1xf32> to vector<2x16xf32>
    %19 = vector.broadcast %1 : vector<1x16xf32> to vector<2x16xf32>
    %20 = arith.mulf %18, %19 : vector<2x16xf32>
    %21 = arith.addf %17, %20 : vector<2x16xf32>
    %22 = vector.broadcast %2 : vector<1x16xf32> to vector<2x16xf32>
    %23 = arith.addf %21, %22 : vector<2x16xf32>
    %c0_17 = arith.constant 0 : index
    %c16 = arith.constant 16 : index
    %24 = vector.load %arg7[%c0_17, %c16] : memref<2x128xf32, #tpu.memory_space<vmem>>, vector<2x16xf32>
    tpu.vector_store %arg7[%c0_17, %c16], %23 {strides = array<i32>} : memref<2x128xf32, #tpu.memory_space<vmem>>, vector<2x16xf32>,
    %c0_18 = arith.constant 0 : index
    %c2 = arith.constant 2 : index
    %c0_19 = arith.constant 0 : index
    %25 = vector.load %arg2[%c0_18, %c2, %c0_19] : memref<2x8x32xf32, #tpu.memory_space<vmem>>, vector<2x1x32xf32>
    %26 = vector.shape_cast %25 : vector<2x1x32xf32> to vector<2x32xf32>
    %c0_20 = arith.constant 0 : index
    %c2_21 = arith.constant 2 : index
    %27 = vector.load %arg3[%c0_20, %c2_21] : memref<2x8xf32, #tpu.memory_space<vmem>>, vector<2x1xf32>
    %cst_22 = arith.constant dense<0.000000e+00> : vector<2x16xf32>
    %28 = tpu.matmul %26, %0, %cst_22 {dimension_numbers = #tpu.dot_dimension_numbers<[1], [0], [0], [1], [0, 0, 1, 1], [], []>} : vector<2x32xf32>, vector<32x16xf32>, vector<2x16xf32> -> vector<2x16xf32>
    %29 = vector.broadcast %27 : vector<2x1xf32> to vector<2x16xf32>
    %30 = vector.broadcast %1 : vector<1x16xf32> to vector<2x16xf32>
    %31 = arith.mulf %29, %30 : vector<2x16xf32>
    %32 = arith.addf %28, %31 : vector<2x16xf32>
    %33 = vector.broadcast %2 : vector<1x16xf32> to vector<2x16xf32>
    %34 = arith.addf %32, %33 : vector<2x16xf32>
    %c0_23 = arith.constant 0 : index
    %c32 = arith.constant 32 : index
    %35 = vector.load %arg7[%c0_23, %c32] : memref<2x128xf32, #tpu.memory_space<vmem>>, vector<2x16xf32>
    tpu.vector_store %arg7[%c0_23, %c32], %34 {strides = array<i32>} : memref<2x128xf32, #tpu.memory_space<vmem>>, vector<2x16xf32>,
    %c0_24 = arith.constant 0 : index
    %c3 = arith.constant 3 : index
    %c0_25 = arith.constant 0 : index
    %36 = vector.load %arg2[%c0_24, %c3, %c0_25] : memref<2x8x32xf32, #tpu.memory_space<vmem>>, vector<2x1x32xf32>
    %37 = vector.shape_cast %36 : vector<2x1x32xf32> to vector<2x32xf32>
    %c0_26 = arith.constant 0 : index
    %c3_27 = arith.constant 3 : index
    %38 = vector.load %arg3[%c0_26, %c3_27] : memref<2x8xf32, #tpu.memory_space<vmem>>, vector<2x1xf32>
    %cst_28 = arith.constant dense<0.000000e+00> : vector<2x16xf32>
    %39 = tpu.matmul %37, %0, %cst_28 {dimension_numbers = #tpu.dot_dimension_numbers<[1], [0], [0], [1], [0, 0, 1, 1], [], []>} : vector<2x32xf32>, vector<32x16xf32>, vector<2x16xf32> -> vector<2x16xf32>
    %40 = vector.broadcast %38 : vector<2x1xf32> to vector<2x16xf32>
    %41 = vector.broadcast %1 : vector<1x16xf32> to vector<2x16xf32>
    %42 = arith.mulf %40, %41 : vector<2x16xf32>
    %43 = arith.addf %39, %42 : vector<2x16xf32>
    %44 = vector.broadcast %2 : vector<1x16xf32> to vector<2x16xf32>
    %45 = arith.addf %43, %44 : vector<2x16xf32>
    %c0_29 = arith.constant 0 : index
    %c48 = arith.constant 48 : index
    %46 = vector.load %arg7[%c0_29, %c48] : memref<2x128xf32, #tpu.memory_space<vmem>>, vector<2x16xf32>
    tpu.vector_store %arg7[%c0_29, %c48], %45 {strides = array<i32>} : memref<2x128xf32, #tpu.memory_space<vmem>>, vector<2x16xf32>,
    %c0_30 = arith.constant 0 : index
    %c4 = arith.constant 4 : index
    %c0_31 = arith.constant 0 : index
    %47 = vector.load %arg2[%c0_30, %c4, %c0_31] : memref<2x8x32xf32, #tpu.memory_space<vmem>>, vector<2x1x32xf32>
    %48 = vector.shape_cast %47 : vector<2x1x32xf32> to vector<2x32xf32>
    %c0_32 = arith.constant 0 : index
    %c4_33 = arith.constant 4 : index
    %49 = vector.load %arg3[%c0_32, %c4_33] : memref<2x8xf32, #tpu.memory_space<vmem>>, vector<2x1xf32>
    %cst_34 = arith.constant dense<0.000000e+00> : vector<2x16xf32>
    %50 = tpu.matmul %48, %0, %cst_34 {dimension_numbers = #tpu.dot_dimension_numbers<[1], [0], [0], [1], [0, 0, 1, 1], [], []>} : vector<2x32xf32>, vector<32x16xf32>, vector<2x16xf32> -> vector<2x16xf32>
    %51 = vector.broadcast %49 : vector<2x1xf32> to vector<2x16xf32>
    %52 = vector.broadcast %1 : vector<1x16xf32> to vector<2x16xf32>
    %53 = arith.mulf %51, %52 : vector<2x16xf32>
    %54 = arith.addf %50, %53 : vector<2x16xf32>
    %55 = vector.broadcast %2 : vector<1x16xf32> to vector<2x16xf32>
    %56 = arith.addf %54, %55 : vector<2x16xf32>
    %c0_35 = arith.constant 0 : index
    %c64 = arith.constant 64 : index
    %57 = vector.load %arg7[%c0_35, %c64] : memref<2x128xf32, #tpu.memory_space<vmem>>, vector<2x16xf32>
    tpu.vector_store %arg7[%c0_35, %c64], %56 {strides = array<i32>} : memref<2x128xf32, #tpu.memory_space<vmem>>, vector<2x16xf32>,
    %c0_36 = arith.constant 0 : index
    %c5 = arith.constant 5 : index
    %c0_37 = arith.constant 0 : index
    %58 = vector.load %arg2[%c0_36, %c5, %c0_37] : memref<2x8x32xf32, #tpu.memory_space<vmem>>, vector<2x1x32xf32>
    %59 = vector.shape_cast %58 : vector<2x1x32xf32> to vector<2x32xf32>
    %c0_38 = arith.constant 0 : index
    %c5_39 = arith.constant 5 : index
    %60 = vector.load %arg3[%c0_38, %c5_39] : memref<2x8xf32, #tpu.memory_space<vmem>>, vector<2x1xf32>
    %cst_40 = arith.constant dense<0.000000e+00> : vector<2x16xf32>
    %61 = tpu.matmul %59, %0, %cst_40 {dimension_numbers = #tpu.dot_dimension_numbers<[1], [0], [0], [1], [0, 0, 1, 1], [], []>} : vector<2x32xf32>, vector<32x16xf32>, vector<2x16xf32> -> vector<2x16xf32>
    %62 = vector.broadcast %60 : vector<2x1xf32> to vector<2x16xf32>
    %63 = vector.broadcast %1 : vector<1x16xf32> to vector<2x16xf32>
    %64 = arith.mulf %62, %63 : vector<2x16xf32>
    %65 = arith.addf %61, %64 : vector<2x16xf32>
    %66 = vector.broadcast %2 : vector<1x16xf32> to vector<2x16xf32>
    %67 = arith.addf %65, %66 : vector<2x16xf32>
    %c0_41 = arith.constant 0 : index
    %c80 = arith.constant 80 : index
    %68 = vector.load %arg7[%c0_41, %c80] : memref<2x128xf32, #tpu.memory_space<vmem>>, vector<2x16xf32>
    tpu.vector_store %arg7[%c0_41, %c80], %67 {strides = array<i32>} : memref<2x128xf32, #tpu.memory_space<vmem>>, vector<2x16xf32>,
    %c0_42 = arith.constant 0 : index
    %c6 = arith.constant 6 : index
    %c0_43 = arith.constant 0 : index
    %69 = vector.load %arg2[%c0_42, %c6, %c0_43] : memref<2x8x32xf32, #tpu.memory_space<vmem>>, vector<2x1x32xf32>
    %70 = vector.shape_cast %69 : vector<2x1x32xf32> to vector<2x32xf32>
    %c0_44 = arith.constant 0 : index
    %c6_45 = arith.constant 6 : index
    %71 = vector.load %arg3[%c0_44, %c6_45] : memref<2x8xf32, #tpu.memory_space<vmem>>, vector<2x1xf32>
    %cst_46 = arith.constant dense<0.000000e+00> : vector<2x16xf32>
    %72 = tpu.matmul %70, %0, %cst_46 {dimension_numbers = #tpu.dot_dimension_numbers<[1], [0], [0], [1], [0, 0, 1, 1], [], []>} : vector<2x32xf32>, vector<32x16xf32>, vector<2x16xf32> -> vector<2x16xf32>
    %73 = vector.broadcast %71 : vector<2x1xf32> to vector<2x16xf32>
    %74 = vector.broadcast %1 : vector<1x16xf32> to vector<2x16xf32>
    %75 = arith.mulf %73, %74 : vector<2x16xf32>
    %76 = arith.addf %72, %75 : vector<2x16xf32>
    %77 = vector.broadcast %2 : vector<1x16xf32> to vector<2x16xf32>
    %78 = arith.addf %76, %77 : vector<2x16xf32>
    %c0_47 = arith.constant 0 : index
    %c96 = arith.constant 96 : index
    %79 = vector.load %arg7[%c0_47, %c96] : memref<2x128xf32, #tpu.memory_space<vmem>>, vector<2x16xf32>
    tpu.vector_store %arg7[%c0_47, %c96], %78 {strides = array<i32>} : memref<2x128xf32, #tpu.memory_space<vmem>>, vector<2x16xf32>,
    %c0_48 = arith.constant 0 : index
    %c7 = arith.constant 7 : index
    %c0_49 = arith.constant 0 : index
    %80 = vector.load %arg2[%c0_48, %c7, %c0_49] : memref<2x8x32xf32, #tpu.memory_space<vmem>>, vector<2x1x32xf32>
    %81 = vector.shape_cast %80 : vector<2x1x32xf32> to vector<2x32xf32>
    %c0_50 = arith.constant 0 : index
    %c7_51 = arith.constant 7 : index
    %82 = vector.load %arg3[%c0_50, %c7_51] : memref<2x8xf32, #tpu.memory_space<vmem>>, vector<2x1xf32>
    %cst_52 = arith.constant dense<0.000000e+00> : vector<2x16xf32>
    %83 = tpu.matmul %81, %0, %cst_52 {dimension_numbers = #tpu.dot_dimension_numbers<[1], [0], [0], [1], [0, 0, 1, 1], [], []>} : vector<2x32xf32>, vector<32x16xf32>, vector<2x16xf32> -> vector<2x16xf32>
    %84 = vector.broadcast %82 : vector<2x1xf32> to vector<2x16xf32>
    %85 = vector.broadcast %1 : vector<1x16xf32> to vector<2x16xf32>
    %86 = arith.mulf %84, %85 : vector<2x16xf32>
    %87 = arith.addf %83, %86 : vector<2x16xf32>
    %88 = vector.broadcast %2 : vector<1x16xf32> to vector<2x16xf32>
    %89 = arith.addf %87, %88 : vector<2x16xf32>
    %c0_53 = arith.constant 0 : index
    %c112 = arith.constant 112 : index
    %90 = vector.load %arg7[%c0_53, %c112] : memref<2x128xf32, #tpu.memory_space<vmem>>, vector<2x16xf32>
    tpu.vector_store %arg7[%c0_53, %c112], %89 {strides = array<i32>} : memref<2x128xf32, #tpu.memory_space<vmem>>, vector<2x16xf32>,
    return
  }
  func.func @transform_0(%arg0: i32, %arg1: i32) -> (i32, i32, i32) {
    %c0_i32 = arith.constant 0 : i32
    %c0_i32_0 = arith.constant 0 : i32
    %c0_i32_1 = arith.constant 0 : i32
    return %arg0, %c0_i32, %c0_i32_0 : i32, i32, i32
  }
  func.func @transform_1(%arg0: i32, %arg1: i32) -> (i32, i32) {
    %c0_i32 = arith.constant 0 : i32
    %c0_i32_0 = arith.constant 0 : i32
    return %arg0, %c0_i32 : i32, i32
  }
  func.func @transform_2(%arg0: i32, %arg1: i32) -> (i32, i32) {
    %c0_i32 = arith.constant 0 : i32
    %c0_i32_0 = arith.constant 0 : i32
    return %c0_i32, %arg1 : i32, i32
  }
  func.func @transform_3(%arg0: i32, %arg1: i32) -> (i32, i32) {
    %c0_i32 = arith.constant 0 : i32
    %c0_i32_0 = arith.constant 0 : i32
    return %c0_i32, %arg1 : i32, i32
  }
  func.func @transform_4(%arg0: i32, %arg1: i32) -> (i32, i32) {
    %c0_i32 = arith.constant 0 : i32
    %c0_i32_0 = arith.constant 0 : i32
    return %c0_i32, %arg1 : i32, i32
  }
  func.func @transform_5(%arg0: i32, %arg1: i32) -> (i32, i32) {
    %c0_i32 = arith.constant 0 : i32
    return %arg0, %arg1 : i32, i32
  }
}

</mosaic_0001>

<llo_original>
// kernel: tpu_custom_call.1
$region0: #{tpu_custom_call.1}
  #allocation0 [shape = 'u32[]', space=smem, size = 0x4, offset = 0x4, fixed_abs, tag = 'smem constant byte address 0x4 - core index']
  #allocation1 [shape = 'u32[72,128]{1,0:T(1,128)}', space=vmem, size = 0x9000, scoped, tag = 'internal scratch']
  %s0 = inlined_call_operand.vmem [shape: f32[2,8,32], index: 0, kind: input, shape index: {}]
  %s1 = inlined_call_operand.vmem [shape: f32[2,8], index: 1, kind: input, shape index: {}]
  %s2 = inlined_call_operand.vmem [shape: f32[32,16], index: 2, kind: input, shape index: {}]
  %s3 = inlined_call_operand.vmem [shape: f32[1,16], index: 3, kind: input, shape index: {}]
  %s4 = inlined_call_operand.vmem [shape: f32[1,16], index: 4, kind: input, shape index: {}]
  %s5 = inlined_call_operand.hbm [shape: f32[2,128], index: 5, kind: output, shape index: {}]
  %s6 = sld [smem:[#allocation0]]
  $region30: #{tpu_custom_call.1} parent=0
    _
  %s8 = ssub.s32 1, %s6
  %s9 = scalar_select 0, %s8, %s6
  $region1: #{tpu_custom_call.1} parent=0
    #allocation2 [shape = 'u8[1024]{0}', space=vmem, size = 0x400, scoped, tag = 'output window, operand 0, single buffered']
    #allocation3 [shape = 's32[1]{0}', space=sflag, size = 0x4, scoped, tag = 'scoped memory for tpu_custom_call.1']
    %10 = vsyncpa [#allocation3], 0
    // Predicated region
    $region2: #{tpu_custom_call.1} parent=1 // pred_check
      _
    $region3: #{tpu_custom_call.1} parent=1 // pred_check_branch
      %12 = sbr.rel (0) target = $region5
    $region4: #{tpu_custom_call.1} parent=1 // pred_region
      _
    $region5: #{tpu_custom_call.1} parent=1 // pred_fallthru
      _
    // Predicated region
    $region6: #{tpu_custom_call.1} parent=1 // pred_check
      _
    $region7: #{tpu_custom_call.1} parent=1 // pred_check_branch
      %14 = sbr.rel (0) target = $region9
    $region8: #{tpu_custom_call.1} parent=1 // pred_region
      _
    $region9: #{tpu_custom_call.1} parent=1 // pred_fallthru
      _
    // Predicated region
    $region10: #{tpu_custom_call.1} parent=1 // pred_check
      _
    $region11: #{tpu_custom_call.1} parent=1 // pred_check_branch
      %16 = sbr.rel (0) target = $region13
    $region12: #{tpu_custom_call.1} parent=1 // pred_region
      _
    $region13: #{tpu_custom_call.1} parent=1 // pred_fallthru
      _
    // Predicated region
    $region14: #{tpu_custom_call.1} parent=1 // pred_check
      _
    $region15: #{tpu_custom_call.1} parent=1 // pred_check_branch
      %18 = sbr.rel (0) target = $region17
    $region16: #{tpu_custom_call.1} parent=1 // pred_region
      _
    $region17: #{tpu_custom_call.1} parent=1 // pred_fallthru
      _
    // Predicated region
    $region18: #{tpu_custom_call.1} parent=1 // pred_check
      _
    $region19: #{tpu_custom_call.1} parent=1 // pred_check_branch
      %20 = sbr.rel (0) target = $region21
    $region20: #{tpu_custom_call.1} parent=1 // pred_region
      _
    $region21: #{tpu_custom_call.1} parent=1 // pred_fallthru
      _
    %v21 = vld [vmem:[%s2] sm:$0xff]
    %v22 = vld [vmem:[%s2 + $0x8] sm:$0xff]
    %v23 = vld [vmem:[%s2 + $0x10] sm:$0xff]
    %v24 = vld [vmem:[%s2 + $0x18] sm:$0xff]
    %v25 = vld [vmem:[%s3] sm:$0x1]
    %v26 = vld [vmem:[%s4] sm:$0x1]
    %v27 = vld [vmem:[%s0] sm:$0x1]
    %v28 = vld [vmem:[%s0 + $0x8] sm:$0x1]
    %v29 = vld [vmem:[%s1] sm:$0x3]
    %31 = vset.pattern.permute.xlu0 0
    %32 = vperm.xlu0 %31, %v29
    %v33 = vpop.permute.xlu0 %32
    %v36 = vperm.slane %v25, 0
    %v38 = vmul.f32 %v33, %v36
    %v41 = vrot.slane %v28, 7
    %vm42 = vcmask 1041409
    %v43 = vsel %vm42, %v41, %v27
    %vm44 = vcmask 261120
    %v45 = vsel %vm44, %v43, 0
    %47 = vmatpush.msra.mxu0 0.0
    %48 = vmatpush.msra.mxu0 0.0
    %49 = vmatpush.msra.mxu0 0.0
    %50 = vmatpush.msra.mxu0 0.0
    %51 = vmatpush.msra.mxu0 0.0
    %52 = vmatpush.msra.mxu0 0.0
    %53 = vmatpush.msra.mxu0 0.0
    %54 = vmatpush.msra.mxu0 0.0
    %55 = vmatpush.msra.mxu0 0.0
    %56 = vmatpush.msra.mxu0 0.0
    %57 = vmatpush.msra.mxu0 0.0
    %58 = vmatpush.msra.mxu0 0.0
    %59 = vmatpush.msra.mxu0 %v24
    %60 = vmatpush.msra.mxu0 %v23
    %61 = vmatpush.msra.mxu0 %v22
    %62 = vmatpush.msra.mxu0 %v21
    %63 = vmatmul.f32.gmra.mxu0 %v45
    %v64 = vpop.f32.mrf.mxu0
    %v65 = vadd.f32 %v38, %v64
    %66 = vdwg.mxu0
    %v68 = vperm.slane %v26, 0
    %v70 = vadd.f32 %v65, %v68
    %vm71 = vcmask 123904
    %72 = vst.msk [vmem:[#allocation2] sm:$0x3] %vm71, %v70
    %v73 = vld [vmem:[%s0 + $0x1] sm:$0x1]
    %v74 = vld [vmem:[%s0 + $0x9] sm:$0x1]
    %v75 = vld [vmem:[%s1] sm:$0x3]
    %77 = vset.pattern.permute.xlu0 1
    %78 = vperm.xlu0 %77, %v75
    %v79 = vpop.permute.xlu0 %78
    %v81 = vmul.f32 %v79, %v36
    %v84 = vrot.slane %v74, 7
    %v85 = vsel %vm42, %v84, %v73
    %v86 = vsel %vm44, %v85, 0
    %88 = vmatpush.msra.mxu0 0.0
    %89 = vmatpush.msra.mxu0 0.0
    %90 = vmatpush.msra.mxu0 0.0
    %91 = vmatpush.msra.mxu0 0.0
    %92 = vmatpush.msra.mxu0 0.0
    %93 = vmatpush.msra.mxu0 0.0
    %94 = vmatpush.msra.mxu0 0.0
    %95 = vmatpush.msra.mxu0 0.0
    %96 = vmatpush.msra.mxu0 0.0
    %97 = vmatpush.msra.mxu0 0.0
    %98 = vmatpush.msra.mxu0 0.0
    %99 = vmatpush.msra.mxu0 0.0
    %100 = vmatpush.msra.mxu0 %v24
    %101 = vmatpush.msra.mxu0 %v23
    %102 = vmatpush.msra.mxu0 %v22
    %103 = vmatpush.msra.mxu0 %v21
    %104 = vmatmul.f32.gmra.mxu0 %v86
    %v105 = vpop.f32.mrf.mxu0
    %v106 = vadd.f32 %v81, %v105
    %107 = vdwg.mxu0
    %v108 = vadd.f32 %v106, %v68
    %110 = vrot.lane.b32.xlu0 %v108, 16
    %v111 = vpop.permute.xlu0 %110
    %vm113 = vcmask 255104
    %114 = vst.msk [vmem:[#allocation2] sm:$0x3] %vm113, %v111
    %v115 = vld [vmem:[%s0 + $0x2] sm:$0x1]
    %v116 = vld [vmem:[%s0 + $0xa] sm:$0x1]
    %v117 = vld [vmem:[%s1] sm:$0x3]
    %119 = vset.pattern.permute.xlu0 2
    %120 = vperm.xlu0 %119, %v117
    %v121 = vpop.permute.xlu0 %120
    %v123 = vmul.f32 %v121, %v36
    %v126 = vrot.slane %v116, 7
    %v127 = vsel %vm42, %v126, %v115
    %v128 = vsel %vm44, %v127, 0
    %130 = vmatpush.msra.mxu0 0.0
    %131 = vmatpush.msra.mxu0 0.0
    %132 = vmatpush.msra.mxu0 0.0
    %133 = vmatpush.msra.mxu0 0.0
    %134 = vmatpush.msra.mxu0 0.0
    %135 = vmatpush.msra.mxu0 0.0
    %136 = vmatpush.msra.mxu0 0.0
    %137 = vmatpush.msra.mxu0 0.0
    %138 = vmatpush.msra.mxu0 0.0
    %139 = vmatpush.msra.mxu0 0.0
    %140 = vmatpush.msra.mxu0 0.0
    %141 = vmatpush.msra.mxu0 0.0
    %142 = vmatpush.msra.mxu0 %v24
    %143 = vmatpush.msra.mxu0 %v23
    %144 = vmatpush.msra.mxu0 %v22
    %145 = vmatpush.msra.mxu0 %v21
    %146 = vmatmul.f32.gmra.mxu0 %v128
    %v147 = vpop.f32.mrf.mxu0
    %v148 = vadd.f32 %v123, %v147
    %149 = vdwg.mxu0
    %v150 = vadd.f32 %v148, %v68
    %152 = vrot.lane.b32.xlu0 %v150, 32
    %v153 = vpop.permute.xlu0 %152
    %vm155 = vcmask 386304
    %156 = vst.msk [vmem:[#allocation2] sm:$0x3] %vm155, %v153
    %v157 = vld [vmem:[%s0 + $0x3] sm:$0x1]
    %v158 = vld [vmem:[%s0 + $0xb] sm:$0x1]
    %v159 = vld [vmem:[%s1] sm:$0x3]
    %161 = vset.pattern.permute.xlu0 3
    %162 = vperm.xlu0 %161, %v159
    %v163 = vpop.permute.xlu0 %162
    %v165 = vmul.f32 %v163, %v36
    %v168 = vrot.slane %v158, 7
    %v169 = vsel %vm42, %v168, %v157
    %v170 = vsel %vm44, %v169, 0
    %172 = vmatpush.msra.mxu0 0.0
    %173 = vmatpush.msra.mxu0 0.0
    %174 = vmatpush.msra.mxu0 0.0
    %175 = vmatpush.msra.mxu0 0.0
    %176 = vmatpush.msra.mxu0 0.0
    %177 = vmatpush.msra.mxu0 0.0
    %178 = vmatpush.msra.mxu0 0.0
    %179 = vmatpush.msra.mxu0 0.0
    %180 = vmatpush.msra.mxu0 0.0
    %181 = vmatpush.msra.mxu0 0.0
    %182 = vmatpush.msra.mxu0 0.0
    %183 = vmatpush.msra.mxu0 0.0
    %184 = vmatpush.msra.mxu0 %v24
    %185 = vmatpush.msra.mxu0 %v23
    %186 = vmatpush.msra.mxu0 %v22
    %187 = vmatpush.msra.mxu0 %v21
    %188 = vmatmul.f32.gmra.mxu0 %v170
    %v189 = vpop.f32.mrf.mxu0
    %v190 = vadd.f32 %v165, %v189
    %191 = vdwg.mxu0
    %v192 = vadd.f32 %v190, %v68
    %194 = vrot.lane.b32.xlu0 %v192, 48
    %v195 = vpop.permute.xlu0 %194
    %vm197 = vcmask 517504
    %198 = vst.msk [vmem:[#allocation2] sm:$0x3] %vm197, %v195
    %v199 = vld [vmem:[%s0 + $0x4] sm:$0x1]
    %v200 = vld [vmem:[%s0 + $0xc] sm:$0x1]
    %v201 = vld [vmem:[%s1] sm:$0x3]
    %203 = vset.pattern.permute.xlu0 4
    %204 = vperm.xlu0 %203, %v201
    %v205 = vpop.permute.xlu0 %204
    %v207 = vmul.f32 %v205, %v36
    %v210 = vrot.slane %v200, 7
    %v211 = vsel %vm42, %v210, %v199
    %v212 = vsel %vm44, %v211, 0
    %214 = vmatpush.msra.mxu0 0.0
    %215 = vmatpush.msra.mxu0 0.0
    %216 = vmatpush.msra.mxu0 0.0
    %217 = vmatpush.msra.mxu0 0.0
    %218 = vmatpush.msra.mxu0 0.0
    %219 = vmatpush.msra.mxu0 0.0
    %220 = vmatpush.msra.mxu0 0.0
    %221 = vmatpush.msra.mxu0 0.0
    %222 = vmatpush.msra.mxu0 0.0
    %223 = vmatpush.msra.mxu0 0.0
    %224 = vmatpush.msra.mxu0 0.0
    %225 = vmatpush.msra.mxu0 0.0
    %226 = vmatpush.msra.mxu0 %v24
    %227 = vmatpush.msra.mxu0 %v23
    %228 = vmatpush.msra.mxu0 %v22
    %229 = vmatpush.msra.mxu0 %v21
    %230 = vmatmul.f32.gmra.mxu0 %v212
    %v231 = vpop.f32.mrf.mxu0
    %v232 = vadd.f32 %v207, %v231
    %233 = vdwg.mxu0
    %v234 = vadd.f32 %v232, %v68
    %236 = vrot.lane.b32.xlu0 %v234, 64
    %v237 = vpop.permute.xlu0 %236
    %vm239 = vcmask 648704
    %240 = vst.msk [vmem:[#allocation2] sm:$0x3] %vm239, %v237
    %v241 = vld [vmem:[%s0 + $0x5] sm:$0x1]
    %v242 = vld [vmem:[%s0 + $0xd] sm:$0x1]
    %v243 = vld [vmem:[%s1] sm:$0x3]
    %245 = vset.pattern.permute.xlu0 5
    %246 = vperm.xlu0 %245, %v243
    %v247 = vpop.permute.xlu0 %246
    %v249 = vmul.f32 %v247, %v36
    %v252 = vrot.slane %v242, 7
    %v253 = vsel %vm42, %v252, %v241
    %v254 = vsel %vm44, %v253, 0
    %256 = vmatpush.msra.mxu0 0.0
    %257 = vmatpush.msra.mxu0 0.0
    %258 = vmatpush.msra.mxu0 0.0
    %259 = vmatpush.msra.mxu0 0.0
    %260 = vmatpush.msra.mxu0 0.0
    %261 = vmatpush.msra.mxu0 0.0
    %262 = vmatpush.msra.mxu0 0.0
    %263 = vmatpush.msra.mxu0 0.0
    %264 = vmatpush.msra.mxu0 0.0
    %265 = vmatpush.msra.mxu0 0.0
    %266 = vmatpush.msra.mxu0 0.0
    %267 = vmatpush.msra.mxu0 0.0
    %268 = vmatpush.msra.mxu0 %v24
    %269 = vmatpush.msra.mxu0 %v23
    %270 = vmatpush.msra.mxu0 %v22
    %271 = vmatpush.msra.mxu0 %v21
    %272 = vmatmul.f32.gmra.mxu0 %v254
    %v273 = vpop.f32.mrf.mxu0
    %v274 = vadd.f32 %v249, %v273
    %275 = vdwg.mxu0
    %v276 = vadd.f32 %v274, %v68
    %278 = vrot.lane.b32.xlu0 %v276, 80
    %v279 = vpop.permute.xlu0 %278
    %vm281 = vcmask 779904
    %282 = vst.msk [vmem:[#allocation2] sm:$0x3] %vm281, %v279
    %v283 = vld [vmem:[%s0 + $0x6] sm:$0x1]
    %v284 = vld [vmem:[%s0 + $0xe] sm:$0x1]
    %v285 = vld [vmem:[%s1] sm:$0x3]
    %287 = vset.pattern.permute.xlu0 6
    %288 = vperm.xlu0 %287, %v285
    %v289 = vpop.permute.xlu0 %288
    %v291 = vmul.f32 %v289, %v36
    %v294 = vrot.slane %v284, 7
    %v295 = vsel %vm42, %v294, %v283
    %v296 = vsel %vm44, %v295, 0
    %298 = vmatpush.msra.mxu0 0.0
    %299 = vmatpush.msra.mxu0 0.0
    %300 = vmatpush.msra.mxu0 0.0
    %301 = vmatpush.msra.mxu0 0.0
    %302 = vmatpush.msra.mxu0 0.0
    %303 = vmatpush.msra.mxu0 0.0
    %304 = vmatpush.msra.mxu0 0.0
    %305 = vmatpush.msra.mxu0 0.0
    %306 = vmatpush.msra.mxu0 0.0
    %307 = vmatpush.msra.mxu0 0.0
    %308 = vmatpush.msra.mxu0 0.0
    %309 = vmatpush.msra.mxu0 0.0
    %310 = vmatpush.msra.mxu0 %v24
    %311 = vmatpush.msra.mxu0 %v23
    %312 = vmatpush.msra.mxu0 %v22
    %313 = vmatpush.msra.mxu0 %v21
    %314 = vmatmul.f32.gmra.mxu0 %v296
    %v315 = vpop.f32.mrf.mxu0
    %v316 = vadd.f32 %v291, %v315
    %317 = vdwg.mxu0
    %v318 = vadd.f32 %v316, %v68
    %320 = vrot.lane.b32.xlu0 %v318, 96
    %v321 = vpop.permute.xlu0 %320
    %vm323 = vcmask 911104
    %324 = vst.msk [vmem:[#allocation2] sm:$0x3] %vm323, %v321
    %v325 = vld [vmem:[%s0 + $0x7] sm:$0x1]
    %v326 = vld [vmem:[%s0 + $0xf] sm:$0x1]
    %v327 = vld [vmem:[%s1] sm:$0x3]
    %329 = vset.pattern.permute.xlu0 7
    %330 = vperm.xlu0 %329, %v327
    %v331 = vpop.permute.xlu0 %330
    %v333 = vmul.f32 %v331, %v36
    %v336 = vrot.slane %v326, 7
    %v337 = vsel %vm42, %v336, %v325
    %v338 = vsel %vm44, %v337, 0
    %340 = vmatpush.msra.mxu0 0.0
    %341 = vmatpush.msra.mxu0 0.0
    %342 = vmatpush.msra.mxu0 0.0
    %343 = vmatpush.msra.mxu0 0.0
    %344 = vmatpush.msra.mxu0 0.0
    %345 = vmatpush.msra.mxu0 0.0
    %346 = vmatpush.msra.mxu0 0.0
    %347 = vmatpush.msra.mxu0 0.0
    %348 = vmatpush.msra.mxu0 0.0
    %349 = vmatpush.msra.mxu0 0.0
    %350 = vmatpush.msra.mxu0 0.0
    %351 = vmatpush.msra.mxu0 0.0
    %352 = vmatpush.msra.mxu0 %v24
    %353 = vmatpush.msra.mxu0 %v23
    %354 = vmatpush.msra.mxu0 %v22
    %355 = vmatpush.msra.mxu0 %v21
    %356 = vmatmul.f32.gmra.mxu0 %v338
    %v357 = vpop.f32.mrf.mxu0
    %v358 = vadd.f32 %v333, %v357
    %359 = vdwg.mxu0
    %v360 = vadd.f32 %v358, %v68
    %362 = vrot.lane.b32.xlu0 %v360, 112
    %v363 = vpop.permute.xlu0 %362
    %vm365 = vcmask 1042304
    %366 = vst.msk [vmem:[#allocation2] sm:$0x3] %vm365, %v363
    // Predicated region
    $region22: #{tpu_custom_call.1} parent=1 // pred_check
      _
    $region23: #{tpu_custom_call.1} parent=1 // pred_check_branch
      %368 = sbr.rel (0) target = $region25
    $region24: #{tpu_custom_call.1} parent=1 // pred_region
      %370 = vsyncadd [#allocation3], 0
      %s372 = sshll.u32 [#allocation2], 4
      %s373 = int_to_ptr.vmem [resolvable:$true] %s372
      %s374 = sshll.u32 %s5, 4
      %s375 = int_to_ptr.hbm [resolvable:$true] %s374
      %377 = dma.vmem_to_hbm [thread:$0]  %s373, 32, %s375, [#allocation3]
    $region25: #{tpu_custom_call.1} parent=1 // pred_fallthru
      _
    // Predicated region
    $region26: #{tpu_custom_call.1} parent=1 // pred_check
      _
    $region27: #{tpu_custom_call.1} parent=1 // pred_check_branch
      %379 = sbr.rel (0) target = $region29
    $region28: #{tpu_custom_call.1} parent=1 // pred_region
      %381 = dma.done [#allocation3], 32
    $region29: #{tpu_custom_call.1} parent=1 // pred_fallthru
      _
    %382 = vsyncpa [#allocation3], 1

</llo_original>
